<compile_context>
chip_gen: v5e
topology: v5e:2x2
jax: 0.10.0
libtpu: 0.0.40
codegen_flags: <defaults>
</compile_context>

<pallas_src>
import functools
import math

import jax
import jax.numpy as jnp
from jax.experimental import pallas as pl
from jax.experimental.pallas import tpu as pltpu


def _round_up(x, m):
    return (x + m - 1) // m * m


# -----------------------------------------------------------------------------
# Generic tiled GEMM kernel: out = act(x @ w + b), f32 accumulation
# -----------------------------------------------------------------------------
def _gemm_bias_act_kernel(x_ref, w_ref, b_ref, o_ref, acc_ref, *, activation):
    k = pl.program_id(2)

    @pl.when(k == 0)
    def _():
        acc_ref[...] = jnp.zeros_like(acc_ref)

    # MXU matmul in native operand dtype, f32 accumulation.
    acc_ref[...] += jnp.dot(x_ref[...], w_ref[...],
                            preferred_element_type=jnp.float32)

    @pl.when(k == pl.num_programs(2) - 1)
    def _():
        y = acc_ref[...] + b_ref[...].astype(jnp.float32)
        if activation == "tanh":
            y = jnp.tanh(y)
        o_ref[...] = y.astype(o_ref.dtype)


def _gemm_bias_act(x, w, b, *, activation, out_dtype,
                   tm=256, tn=512, tk=512, vmem_limit_bytes=None):
    """x: (M, K), w: (K, N), b: (N,) -> act(x @ w + b): (M, N)."""
    M, K = x.shape
    Kw, N = w.shape
    assert Kw == K and b.shape == (N,)

    # M tile: multiple of 8; pad rows so the grid divides evenly.
    tm = max(8, min(tm, _round_up(M, 8)))
    tm -= tm % 8
    M_pad = _round_up(M, tm)
    if M_pad != M:
        x = jnp.pad(x, ((0, M_pad - M), (0, 0)))

    # N / K tiles: multiple of 128 that divides, else fall back to full extent.
    tn = min(tn, N)
    if N % tn != 0 or tn % 128 != 0:
        tn = N
    tk = min(tk, K)
    if K % tk != 0 or tk % 128 != 0:
        tk = K

    in_is = jnp.dtype(x.dtype).itemsize
    out_is = jnp.dtype(out_dtype).itemsize
    if vmem_limit_bytes is None:
        # Double-buffered input tiles + double-buffered output tile + f32 acc.
        footprint = (2 * (tm * tk + tk * tn + tn) * in_is
                     + 2 * tm * tn * out_is + tm * tn * 4)
        vmem_limit_bytes = int(min(max(2 * footprint, 32 * 1024 * 1024),
                                   96 * 1024 * 1024))

    grid = (M_pad // tm, N // tn, K // tk)
    out = pl.pallas_call(
        functools.partial(_gemm_bias_act_kernel, activation=activation),
        out_shape=jax.ShapeDtypeStruct((M_pad, N), out_dtype),
        grid_spec=pltpu.PrefetchScalarGridSpec(
            num_scalar_prefetch=0,
            grid=grid,                                  # reduction (K) axis last
            in_specs=[
                pl.BlockSpec((tm, tk), lambda i, j, k: (i, k)),
                pl.BlockSpec((tk, tn), lambda i, j, k: (k, j)),
                pl.BlockSpec((1, tn), lambda i, j, k: (0, j)),
            ],
            out_specs=pl.BlockSpec((tm, tn), lambda i, j, k: (i, j)),
            scratch_shapes=[pltpu.VMEM((tm, tn), jnp.float32)],
        ),
        compiler_params=pltpu.CompilerParams(
            dimension_semantics=("parallel", "parallel", "arbitrary"),
            vmem_limit_bytes=vmem_limit_bytes,
        ),
        cost_estimate=pl.CostEstimate(
            flops=2 * M_pad * N * K,
            transcendentals=(M_pad * N if activation == "tanh" else 0),
            bytes_accessed=(M_pad * K + K * N + N) * in_is + M_pad * N * out_is,
        ),
    )(x, w, b.reshape(1, N))
    return out[:M] if M_pad != M else out


# -----------------------------------------------------------------------------
# Row gather kernel: out[m] = table[idx[m]]  (table resident in VMEM)
# -----------------------------------------------------------------------------
def _gather_rows_kernel(idx_ref, table_ref, o_ref, *, rows_per_step):
    base = pl.program_id(0) * rows_per_step
    for r in range(rows_per_step):                       # static unroll
        o_ref[pl.ds(r, 1), :] = table_ref[pl.ds(idx_ref[base + r], 1), :]


def _gather_rows(prefix, table, *, rows_per_step=8, vmem_limit_bytes=None):
    """prefix: int (B, P); table: (R, kv) -> (B, P, kv) gathered rows."""
    B, P = prefix.shape
    R, kv = table.shape
    M = B * P

    rows_per_step = max(8, _round_up(rows_per_step, 8))
    M_pad = _round_up(M, rows_per_step)

    # Clamp indices (jnp.take-style clipping; avoids OOB DMA for bad indices).
    idx = jnp.clip(prefix.reshape(M).astype(jnp.int32), 0, R - 1)
    if M_pad != M:
        idx = jnp.pad(idx, (0, M_pad - M))

    table_bytes = R * kv * jnp.dtype(table.dtype).itemsize
    if vmem_limit_bytes is None:
        vmem_limit_bytes = int(min(max(4 * table_bytes, 32 * 1024 * 1024),
                                   96 * 1024 * 1024))

    out = pl.pallas_call(
        functools.partial(_gather_rows_kernel, rows_per_step=rows_per_step),
        out_shape=jax.ShapeDtypeStruct((M_pad, kv), table.dtype),
        grid_spec=pltpu.PrefetchScalarGridSpec(
            num_scalar_prefetch=1,                      # indices -> SMEM
            grid=(M_pad // rows_per_step,),
            in_specs=[
                # Whole table, constant block index -> fetched to VMEM once.
                pl.BlockSpec((R, kv), lambda i, idx_ref: (0, 0)),
            ],
            out_specs=pl.BlockSpec((rows_per_step, kv), lambda i, idx_ref: (i, 0)),
        ),
        compiler_params=pltpu.CompilerParams(
            dimension_semantics=("parallel",),
            vmem_limit_bytes=vmem_limit_bytes,
        ),
    )(idx, table)
    out = out[:M]
    return out.reshape(B, P, kv)


# -----------------------------------------------------------------------------
# Public wrapper mirroring PrefixEncoder.forward
# -----------------------------------------------------------------------------
def prefix_encoder_pallas(prefix, embedding, w1_t=None, b1=None, w2_t=None, b2=None,
                          *, prefix_projection=True, compute_dtype=None,
                          tm=256, tn=512, tk=512, gather_rows_per_step=8,
                          vmem_limit_bytes=None):
    """prefix: int (B, P); embedding: (pre_seq_len, kv_size);
    w1_t: (kv_size, hidden) = Linear(kv,hidden).weight.T; b1: (hidden,);
    w2_t: (hidden, kv_size) = Linear(hidden,kv).weight.T; b2: (kv_size,).
    Returns (B, P, kv_size)."""
    if prefix_projection:
        cd = compute_dtype if compute_dtype is not None else embedding.dtype
        # Project the whole embedding table once; result is gathered afterwards,
        # so FLOPs/weight HBM bytes are independent of batch * prefix length.
        x = embedding.astype(cd)
        h = _gemm_bias_act(x, w1_t.astype(cd), b1, activation="tanh",
                           out_dtype=cd, tm=tm, tn=tn, tk=tk,
                           vmem_limit_bytes=vmem_limit_bytes)
        table = _gemm_bias_act(h, w2_t.astype(cd), b2, activation=None,
                               out_dtype=embedding.dtype, tm=tm, tn=tn, tk=tk,
                               vmem_limit_bytes=vmem_limit_bytes)
    else:
        table = embedding
    return _gather_rows(prefix, table, rows_per_step=gather_rows_per_step)


def prefix_encoder_reference(prefix, embedding, w1_t=None, b1=None, w2_t=None, b2=None,
                             *, prefix_projection=True):
    tok = jnp.take(embedding, prefix, axis=0)                        # (B, P, kv)
    if not prefix_projection:
        return tok
    h = jnp.tanh(tok.astype(jnp.float32) @ w1_t.astype(jnp.float32)
                 + b1.astype(jnp.float32))
    out = h @ w2_t.astype(jnp.float32) + b2.astype(jnp.float32)
    return out.astype(embedding.dtype)


if __name__ == "__main__":
    # Small config consistent with ChatGLMConfig:
    # num_layers=2, kv_channels=16, multi_query_group_num=2 -> kv_size=128
    num_layers, kv_channels, multi_query_group_num = 2, 16, 2
    kv_size = num_layers * kv_channels * multi_query_group_num * 2   # 128
    pre_seq_len, hidden_size = 16, 256
    batch, prefix_len = 2, 8

    key = jax.random.PRNGKey(0)
    k_idx, k_e, k_w1, k_b1, k_w2, k_b2 = jax.random.split(key, 6)

    prefix = jax.random.randint(k_idx, (batch, prefix_len), 0, pre_seq_len,
                                dtype=jnp.int32)
    embedding = jax.random.normal(k_e, (pre_seq_len, kv_size), dtype=jnp.float32)
    # nn.Linear(kv, hidden).weight is (hidden, kv); we store its transpose.
    w1_t = jax.random.normal(k_w1, (kv_size, hidden_size), dtype=jnp.float32) \
        * (1.0 / math.sqrt(kv_size))
    b1 = 0.1 * jax.random.normal(k_b1, (hidden_size,), dtype=jnp.float32)
    # nn.Linear(hidden, kv).weight is (kv, hidden); we store its transpose.
    w2_t = jax.random.normal(k_w2, (hidden_size, kv_size), dtype=jnp.float32) \
        * (1.0 / math.sqrt(hidden_size))
    b2 = 0.1 * jax.random.normal(k_b2, (kv_size,), dtype=jnp.float32)

    # Projection path, f32 operands, small tiles so both GEMM grids have >1 step
    # (GEMM1: parallel N axis has 2 programs; GEMM2: K accumulation has 2 steps).
    out_proj = prefix_encoder_pallas(prefix, embedding, w1_t, b1, w2_t, b2,
                                     prefix_projection=True, tm=16, tn=128, tk=128)
    out_proj = jax.block_until_ready(out_proj)
    ref_proj = prefix_encoder_reference(prefix, embedding, w1_t, b1, w2_t, b2,
                                        prefix_projection=True)
    assert out_proj.shape == (batch, prefix_len, kv_size)
    assert jnp.allclose(out_proj, ref_proj, atol=2e-3, rtol=2e-3)

    # Projection path with bf16 MXU operands (the perf configuration), default tiles.
    out_bf16 = prefix_encoder_pallas(prefix, embedding, w1_t, b1, w2_t, b2,
                                     prefix_projection=True,
                                     compute_dtype=jnp.bfloat16)
    out_bf16 = jax.block_until_ready(out_bf16)
    assert jnp.allclose(out_bf16.astype(jnp.float32), ref_proj,
                        atol=5e-2, rtol=5e-2)

    # prefix_projection=False path: pure embedding gather.
    out_emb = prefix_encoder_pallas(prefix, embedding, prefix_projection=False)
    out_emb = jax.block_until_ready(out_emb)
    ref_emb = prefix_encoder_reference(prefix, embedding, prefix_projection=False)
    assert out_emb.shape == (batch, prefix_len, kv_size)
    assert jnp.allclose(out_emb, ref_emb)

    print("KERNEL_OK")
</pallas_src>

<mosaic_0001>
module attributes {stable_mosaic.version = 11 : i64} {
  func.func @_gemm_bias_act_kernel(%arg0: i32, %arg1: i32, %arg2: i32, %arg3: memref<16x128xf32, #tpu.memory_space<vmem>>, %arg4: memref<128x128xf32, #tpu.memory_space<vmem>>, %arg5: memref<1x128xf32, #tpu.memory_space<vmem>>, %arg6: memref<16x128xf32, #tpu.memory_space<vmem>>, %arg7: memref<16x128xf32, #tpu.memory_space<vmem>>) attributes {dimension_semantics = [#tpu.dimension_semantics<parallel>, #tpu.dimension_semantics<parallel>, #tpu.dimension_semantics<arbitrary>], iteration_bounds = array<i64: 1, 2, 1>, scalar_prefetch = 0 : i64, scratch_operands = 1 : i64, tpu.core_type = #tpu.core_type<tc>, window_params = [{transform_indices = @transform_0, window_bounds = array<i64: 16, 128>}, {transform_indices = @transform_1, window_bounds = array<i64: 128, 128>}, {transform_indices = @transform_2, window_bounds = array<i64: 1, 128>}, {transform_indices = @transform_3, window_bounds = array<i64: 16, 128>}]} {
    %c0_i32 = arith.constant 0 : i32
    %0 = arith.cmpi eq, %arg2, %c0_i32 : i32
    %1 = arith.extui %0 : i1 to i32
    %c0_i32_0 = arith.constant 0 : i32
    %2 = arith.cmpi ne, %1, %c0_i32_0 : i32
    scf.if %2 {
      %cst_10 = arith.constant 0.000000e+00 : f32
      %12 = vector.broadcast %cst_10 : f32 to vector<16x128xf32>
      %c0_11 = arith.constant 0 : index
      %c0_12 = arith.constant 0 : index
      %13 = vector.load %arg7[%c0_11, %c0_12] : memref<16x128xf32, #tpu.memory_space<vmem>>, vector<16x128xf32>
      tpu.vector_store %arg7[%c0_11, %c0_12], %12 {strides = array<i32>} : memref<16x128xf32, #tpu.memory_space<vmem>>, vector<16x128xf32>,
    } else {
    }
    %c0 = arith.constant 0 : index
    %c0_1 = arith.constant 0 : index
    %3 = vector.load %arg7[%c0, %c0_1] : memref<16x128xf32, #tpu.memory_space<vmem>>, vector<16x128xf32>
    %c0_2 = arith.constant 0 : index
    %c0_3 = arith.constant 0 : index
    %4 = vector.load %arg3[%c0_2, %c0_3] : memref<16x128xf32, #tpu.memory_space<vmem>>, vector<16x128xf32>
    %c0_4 = arith.constant 0 : index
    %c0_5 = arith.constant 0 : index
    %5 = vector.load %arg4[%c0_4, %c0_5] : memref<128x128xf32, #tpu.memory_space<vmem>>, vector<128x128xf32>
    %cst = arith.constant dense<0.000000e+00> : vector<16x128xf32>
    %6 = tpu.matmul %4, %5, %cst {dimension_numbers = #tpu.dot_dimension_numbers<[1], [0], [0], [1], [0, 0, 1, 1], [], []>} : vector<16x128xf32>, vector<128x128xf32>, vector<16x128xf32> -> vector<16x128xf32>
    %7 = arith.addf %3, %6 : vector<16x128xf32>
    %c0_6 = arith.constant 0 : index
    %c0_7 = arith.constant 0 : index
    %8 = vector.load %arg7[%c0_6, %c0_7] : memref<16x128xf32, #tpu.memory_space<vmem>>, vector<16x128xf32>
    tpu.vector_store %arg7[%c0_6, %c0_7], %7 {strides = array<i32>} : memref<16x128xf32, #tpu.memory_space<vmem>>, vector<16x128xf32>,
    %c0_i32_8 = arith.constant 0 : i32
    %9 = arith.cmpi eq, %arg2, %c0_i32_8 : i32
    %10 = arith.extui %9 : i1 to i32
    %c0_i32_9 = arith.constant 0 : i32
    %11 = arith.cmpi ne, %10, %c0_i32_9 : i32
    scf.if %11 {
      %c0_10 = arith.constant 0 : index
      %c0_11 = arith.constant 0 : index
      %12 = vector.load %arg7[%c0_10, %c0_11] : memref<16x128xf32, #tpu.memory_space<vmem>>, vector<16x128xf32>
      %c0_12 = arith.constant 0 : index
      %c0_13 = arith.constant 0 : index
      %13 = vector.load %arg5[%c0_12, %c0_13] : memref<1x128xf32, #tpu.memory_space<vmem>>, vector<1x128xf32>
      %14 = vector.broadcast %13 : vector<1x128xf32> to vector<16x128xf32>
      %15 = arith.addf %12, %14 : vector<16x128xf32>
      %16 = math.tanh %15 : vector<16x128xf32>
      %c0_14 = arith.constant 0 : index
      %c0_15 = arith.constant 0 : index
      %17 = vector.load %arg6[%c0_14, %c0_15] : memref<16x128xf32, #tpu.memory_space<vmem>>, vector<16x128xf32>
      tpu.vector_store %arg6[%c0_14, %c0_15], %16 {strides = array<i32>} : memref<16x128xf32, #tpu.memory_space<vmem>>, vector<16x128xf32>,
    } else {
    }
    return
  }
  func.func @transform_0(%arg0: i32, %arg1: i32, %arg2: i32) -> (i32, i32) {
    %c0_i32 = arith.constant 0 : i32
    return %arg0, %arg2 : i32, i32
  }
  func.func @transform_1(%arg0: i32, %arg1: i32, %arg2: i32) -> (i32, i32) {
    %c0_i32 = arith.constant 0 : i32
    return %arg2, %arg1 : i32, i32
  }
  func.func @transform_2(%arg0: i32, %arg1: i32, %arg2: i32) -> (i32, i32) {
    %c0_i32 = arith.constant 0 : i32
    %c0_i32_0 = arith.constant 0 : i32
    return %c0_i32, %arg1 : i32, i32
  }
  func.func @transform_3(%arg0: i32, %arg1: i32, %arg2: i32) -> (i32, i32) {
    %c0_i32 = arith.constant 0 : i32
    return %arg0, %arg1 : i32, i32
  }
}

</mosaic_0001>

<llo_original>
// kernel: tpu_custom_call.1
$region0: #{tpu_custom_call.1}
  #allocation0 [shape = 'u32[]', space=smem, size = 0x4, offset = 0x4, fixed_abs, tag = 'smem constant byte address 0x4 - core index']
  #allocation1 [shape = 'u32[72,128]{1,0:T(1,128)}', space=vmem, size = 0x9000, scoped, tag = 'internal scratch']
  #allocation2 [shape = 'f32[16,128]{1,0:T(8,128)}', space=vmem, size = 0x2000, scoped, tag = 'scratch operand']
  %s0 = inlined_call_operand.hbm [shape: f32[16,128], index: 0, kind: input, shape index: {}]
  %s1 = inlined_call_operand.hbm [shape: f32[128,256], index: 1, kind: input, shape index: {}]
  %s2 = inlined_call_operand.hbm [shape: f32[1,256], index: 2, kind: input, shape index: {}]
  %s3 = inlined_call_operand.hbm [shape: f32[16,256], index: 3, kind: output, shape index: {}]
  %s4 = sld [smem:[#allocation0]]
  $region65: #{tpu_custom_call.1} parent=0
    _
  %s6 = ssub.s32 1, %s4
  %s7 = scalar_select 0, %s6, %s4
  $region1: #{tpu_custom_call.1} parent=0
    #allocation3 [shape = 'u8[8192]{0}', space=vmem, size = 0x2000, scoped, tag = 'input window, operand 0, single buffered']
    #allocation4 [shape = 's32[2]{0}', space=sflag, size = 0x8, scoped, tag = 'scoped memory for tpu_custom_call.1']
    #allocation5 [shape = 's32[2]{0}', space=sflag, size = 0x8, scoped, tag = 'scoped memory for tpu_custom_call.1']
    #allocation6 [shape = 'u8[131072]{0}', space=vmem, size = 0x20000, scoped, tag = 'input window, operand 1']
    #allocation7 [shape = 's32[2]{0}', space=sflag, size = 0x8, scoped, tag = 'scoped memory for tpu_custom_call.1']
    #allocation8 [shape = 'u8[1024]{0}', space=vmem, size = 0x400, scoped, tag = 'input window, operand 2']
    #allocation9 [shape = 'u8[16384]{0}', space=vmem, size = 0x4000, scoped, tag = 'output window, operand 0']
    %8 = vsyncpa [#allocation4], 0
    %9 = vsyncpa [#allocation7], 0
    %s10 = scalar_lea.sflag [#allocation7], 1
    %11 = vsyncpa %s10, 0
    %12 = vsyncpa [#allocation5], 0
    %s13 = scalar_lea.sflag [#allocation5], 1
    %14 = vsyncpa %s13, 0
    loop: start=0, step=1, limit=4
    $region2: #{tpu_custom_call.1} parent=1 // loop_pre_header
      _
    $region3: #{tpu_custom_call.1} parent=1 // loop_header
      %s16 = sphi 0, %s20
      %p17 = scmp.ge.s32.totalorder %s16, 4
      %s23 = sphi 0, %s42
      %s24 = sphi 0, %s38
      %s25 = sphi 0, %s34
      %s26 = sphi 0, %s23
      %s27 = sphi 0, %s24
      %s28 = sphi 0, %s25
      %s29 = sphi 0, %s26
      %s30 = sphi 0, %s27
      %s31 = sphi 0, %s28
      %s47 = sphi 0, %s49
      %s50 = sphi 0, %s47
      %s51 = sphi 0, %s50
      %s67 = sphi 0, %s51
      %s75 = sphi 0, %s77
      %s78 = sphi 0, %s75
      %s79 = sphi 0, %s78
      %s95 = sphi 0, %s79
      %s101 = sphi 0, %s103
      %s104 = sphi 0, %s101
      %s105 = sphi 0, %s104
      %s121 = sphi 0, %s105
      %s129 = sphi 0, %s131
      %s132 = sphi 0, %s129
      %s133 = sphi 0, %s132
      %s149 = sphi 0, %s133
    $region4: #{tpu_custom_call.1} parent=1 // loop_header_branch
      %19 = sbr.rel (%p17) target = $region8
    $region5: #{tpu_custom_call.1} parent=1 // loop_body
      %s21 = ssub.s32 %s16, 1
      %s22 = ssub.s32 %s16, 2
      %s32 = sadd.s32 1, %s25
      %p33 = scmp.ge.s32.totalorder %s32, 1
      %s34 = scalar_select %p33, 0, %s32
      %s35 = sadd.s32 1, %s24
      %s36 = scalar_select %p33, %s35, %s24
      %p37 = scmp.ge.s32.totalorder %s36, 2
      %s38 = scalar_select %p37, 0, %s36
      %s39 = sadd.s32 1, %s23
      %s40 = scalar_select %p37, %s39, %s23
      %p41 = scmp.ge.s32.totalorder %s40, 1
      %s42 = scalar_select %p41, 0, %s40
      %s43 = ssub.s32 %s23, %s42
      %s44 = ssub.s32 %s25, %s34
      %s45 = sor.u32 %s43, %s44
      %p46 = scmp.eq.s32.totalorder %s45, 0
      %s48 = sadd.s32 %s47, 1
      %s49 = scalar_select %p46, %s47, %s48
      %p52 = pneg %p46
      %p53 = scmp.eq.s32.totalorder %s16, 1
      %p54 = por %p52, %p53
      %p55 = scmp.ne.s32.totalorder %s47, %s50
      %p56 = scmp.eq.s32.totalorder %s16, 0
      %p57 = por %p55, %p56
      %p58 = scmp.ne.s32.totalorder %s47, %s50
      %p59 = scmp.eq.s32.totalorder %s21, 1
      %p60 = por %p58, %p59
      %p61 = scmp.ne.s32.totalorder %s50, %s51
      %p62 = scmp.eq.s32.totalorder %s21, 0
      %p63 = por %p61, %p62
      %p64 = scmp.ne.s32.totalorder %s50, %s51
      %p65 = scmp.eq.s32.totalorder %s22, 1
      %p66 = por %p64, %p65
      %p68 = scmp.ne.s32.totalorder %s51, %s67
      %p69 = scmp.eq.s32.totalorder %s22, 0
      %p70 = por %p68, %p69
      %s71 = ssub.s32 %s25, %s34
      %s72 = ssub.s32 %s24, %s38
      %s73 = sor.u32 %s71, %s72
      %p74 = scmp.eq.s32.totalorder %s73, 0
      %s76 = sadd.s32 %s75, 1
      %s77 = scalar_select %p74, %s75, %s76
      %p80 = pneg %p74
      %p81 = scmp.eq.s32.totalorder %s16, 1
      %p82 = por %p80, %p81
      %p83 = scmp.ne.s32.totalorder %s75, %s78
      %p84 = scmp.eq.s32.totalorder %s16, 0
      %p85 = por %p83, %p84
      %p86 = scmp.ne.s32.totalorder %s75, %s78
      %p87 = scmp.eq.s32.totalorder %s21, 1
      %p88 = por %p86, %p87
      %p89 = scmp.ne.s32.totalorder %s78, %s79
      %p90 = scmp.eq.s32.totalorder %s21, 0
      %p91 = por %p89, %p90
      %p92 = scmp.ne.s32.totalorder %s78, %s79
      %p93 = scmp.eq.s32.totalorder %s22, 1
      %p94 = por %p92, %p93
      %p96 = scmp.ne.s32.totalorder %s79, %s95
      %p97 = scmp.eq.s32.totalorder %s22, 0
      %p98 = por %p96, %p97
      %s99 = ssub.s32 %s24, %s38
      %p100 = scmp.eq.s32.totalorder %s99, 0
      %s102 = sadd.s32 %s101, 1
      %s103 = scalar_select %p100, %s101, %s102
      %p106 = pneg %p100
      %p107 = scmp.eq.s32.totalorder %s16, 1
      %p108 = por %p106, %p107
      %p109 = scmp.ne.s32.totalorder %s101, %s104
      %p110 = scmp.eq.s32.totalorder %s16, 0
      %p111 = por %p109, %p110
      %p112 = scmp.ne.s32.totalorder %s101, %s104
      %p113 = scmp.eq.s32.totalorder %s21, 1
      %p114 = por %p112, %p113
      %p115 = scmp.ne.s32.totalorder %s104, %s105
      %p116 = scmp.eq.s32.totalorder %s21, 0
      %p117 = por %p115, %p116
      %p118 = scmp.ne.s32.totalorder %s104, %s105
      %p119 = scmp.eq.s32.totalorder %s22, 1
      %p120 = por %p118, %p119
      %p122 = scmp.ne.s32.totalorder %s105, %s121
      %p123 = scmp.eq.s32.totalorder %s22, 0
      %p124 = por %p122, %p123
      %s125 = ssub.s32 %s23, %s42
      %s126 = ssub.s32 %s24, %s38
      %s127 = sor.u32 %s125, %s126
      %p128 = scmp.eq.s32.totalorder %s127, 0
      %s130 = sadd.s32 %s129, 1
      %s131 = scalar_select %p128, %s129, %s130
      %p134 = pneg %p128
      %p135 = scmp.eq.s32.totalorder %s16, 1
      %p136 = por %p134, %p135
      %p137 = scmp.ne.s32.totalorder %s129, %s132
      %p138 = scmp.eq.s32.totalorder %s16, 0
      %p139 = por %p137, %p138
      %p140 = scmp.ne.s32.totalorder %s129, %s132
      %p141 = scmp.eq.s32.totalorder %s21, 1
      %p142 = por %p140, %p141
      %p143 = scmp.ne.s32.totalorder %s132, %s133
      %p144 = scmp.eq.s32.totalorder %s21, 0
      %p145 = por %p143, %p144
      %p146 = scmp.ne.s32.totalorder %s132, %s133
      %p147 = scmp.eq.s32.totalorder %s22, 1
      %p148 = por %p146, %p147
      %p150 = scmp.ne.s32.totalorder %s133, %s149
      %p151 = scmp.eq.s32.totalorder %s22, 0
      %p152 = por %p150, %p151
      %p153 = scmp.le.s32.totalorder 1, %s16
      %p154 = scmp.lt.s32.totalorder %s16, 3
      %p155 = pnand %p153, %p154
      %p156 = pneg %p155
      // Predicated region
      $region9: #{tpu_custom_call.1} parent=5 // pred_check
        _
      $region10: #{tpu_custom_call.1} parent=5 // pred_check_branch
        %158 = sbr.rel (%p155) target = $region12
      $region11: #{tpu_custom_call.1} parent=5 // pred_region
        %s159 = ssub.s32 %s16, 1
        // Predicated region
        $region13: #{tpu_custom_call.1} parent=11 // pred_check
          %p160 = pneg %p63
        $region14: #{tpu_custom_call.1} parent=11 // pred_check_branch
          %162 = sbr.rel (%p160) target = $region16
        $region15: #{tpu_custom_call.1} parent=11 // pred_region
          %s163 = smul.u32 2, %s26
          %165 = vsyncadd [#allocation4], 0
          %s166 = sadd.s32 %s28, %s163
          %s167 = smul.addr %s166, 8
          %s168 = scalar_lea.hbm %s0, %s167
          %s169 = sshll.u32 %s168, 4
          %s170 = int_to_ptr.hbm [resolvable:$true] %s169
          %s171 = sshll.u32 [#allocation3], 4
          %s172 = int_to_ptr.vmem [resolvable:$true] %s171
          %177 = dma.hbm_to_vmem [thread:$0]  %s170, 256, %s172, [#allocation4], 128, 128, 8
        $region16: #{tpu_custom_call.1} parent=11 // pred_fallthru
          _
      $region12: #{tpu_custom_call.1} parent=5 // pred_fallthru
        _
      %p178 = scmp.lt.s32.totalorder %s16, 2
      // Predicated region
      $region17: #{tpu_custom_call.1} parent=5 // pred_check
        %p179 = pneg %p178
      $region18: #{tpu_custom_call.1} parent=5 // pred_check_branch
        %181 = sbr.rel (%p179) target = $region20
      $region19: #{tpu_custom_call.1} parent=5 // pred_region
        // Predicated region
        $region21: #{tpu_custom_call.1} parent=19 // pred_check
          %p182 = pneg %p85
        $region22: #{tpu_custom_call.1} parent=19 // pred_check_branch
          %184 = sbr.rel (%p182) target = $region24
        $region23: #{tpu_custom_call.1} parent=19 // pred_region
          %s185 = sand.u32 %s16, 1
          %s186 = scalar_lea.sflag [#allocation7], %s185
          %s187 = sand.u32 %s75, 1
          %s188 = smul.addr %s187, 128
          %s189 = scalar_lea.vmem [#allocation6], %s188
          %s190 = smul.u32 16, %s25
          %192 = vsyncadd %s186, 0
          %s193 = smul.addr %s190, 2
          %s194 = sadd.s32 %s24, %s193
          %s195 = smul.addr %s194, 8
          %s196 = scalar_lea.hbm %s1, %s195
          %s197 = sshll.u32 %s196, 4
          %s198 = int_to_ptr.hbm [resolvable:$true] %s197
          %s199 = sshll.u32 %s189, 4
          %s200 = int_to_ptr.vmem [resolvable:$true] %s199
          %205 = dma.hbm_to_vmem [thread:$0]  %s198, 2048, %s200, %s186, 256, 128, 8
        $region24: #{tpu_custom_call.1} parent=19 // pred_fallthru
          _
        // Predicated region
        $region25: #{tpu_custom_call.1} parent=19 // pred_check
          %p206 = pneg %p111
        $region26: #{tpu_custom_call.1} parent=19 // pred_check_branch
          %208 = sbr.rel (%p206) target = $region28
        $region27: #{tpu_custom_call.1} parent=19 // pred_region
          %s209 = sand.u32 %s16, 1
          %s210 = scalar_lea.sflag [#allocation7], %s209
          %s211 = sand.u32 %s101, 1
          %s212 = scalar_lea.vmem [#allocation8], %s211
          %214 = vsyncadd %s210, 0
          %s215 = scalar_lea.hbm %s2, %s24
          %s217 = sshll.u32 %s215, 4
          %s218 = int_to_ptr.hbm [resolvable:$true] %s217
          %s219 = sshll.u32 %s212, 4
          %s220 = int_to_ptr.vmem [resolvable:$true] %s219
          %222 = dma.hbm_to_vmem [thread:$0]  %s218, 16, %s220, %s210
        $region28: #{tpu_custom_call.1} parent=19 // pred_fallthru
          _
      $region20: #{tpu_custom_call.1} parent=5 // pred_fallthru
        _
      %p223 = scmp.le.s32.totalorder 1, %s16
      %p224 = scmp.lt.s32.totalorder %s16, 3
      %p225 = pnand %p223, %p224
      %p226 = pneg %p225
      // Predicated region
      $region29: #{tpu_custom_call.1} parent=5 // pred_check
        _
      $region30: #{tpu_custom_call.1} parent=5 // pred_check_branch
        %228 = sbr.rel (%p225) target = $region32
      $region31: #{tpu_custom_call.1} parent=5 // pred_region
        %s229 = ssub.s32 %s16, 1
        // Predicated region
        $region33: #{tpu_custom_call.1} parent=31 // pred_check
          %p230 = pneg %p63
        $region34: #{tpu_custom_call.1} parent=31 // pred_check_branch
          %232 = sbr.rel (%p230) target = $region36
        $region35: #{tpu_custom_call.1} parent=31 // pred_region
          %234 = dma.done [#allocation4], 256
        $region36: #{tpu_custom_call.1} parent=31 // pred_fallthru
          _
        %s235 = sand.u32 %s21, 1
        %s236 = scalar_lea.sflag [#allocation7], %s235
        %s237 = sand.u32 %s78, 1
        %s238 = smul.addr %s237, 128
        %s239 = scalar_lea.vmem [#allocation6], %s238
        // Predicated region
        $region37: #{tpu_custom_call.1} parent=31 // pred_check
          %p240 = pneg %p91
        $region38: #{tpu_custom_call.1} parent=31 // pred_check_branch
          %242 = sbr.rel (%p240) target = $region40
        $region39: #{tpu_custom_call.1} parent=31 // pred_region
          %244 = dma.done %s236, 2048
        $region40: #{tpu_custom_call.1} parent=31 // pred_fallthru
          _
        %s245 = sand.u32 %s21, 1
        %s246 = scalar_lea.sflag [#allocation7], %s245
        %s247 = sand.u32 %s104, 1
        %s248 = scalar_lea.vmem [#allocation8], %s247
        // Predicated region
        $region41: #{tpu_custom_call.1} parent=31 // pred_check
          %p249 = pneg %p117
        $region42: #{tpu_custom_call.1} parent=31 // pred_check_branch
          %251 = sbr.rel (%p249) target = $region44
        $region43: #{tpu_custom_call.1} parent=31 // pred_region
          %253 = dma.done %s246, 16
        $region44: #{tpu_custom_call.1} parent=31 // pred_fallthru
          _
        %p254 = pneg %p63
        %p255 = pneg %p60
        %s256 = sand.u32 %s21, 1
        %s257 = scalar_lea.sflag [#allocation7], %s256
        %s258 = sand.u32 %s78, 1
        %s259 = smul.addr %s258, 128
        %s260 = scalar_lea.vmem [#allocation6], %s259
        %p261 = pneg %p91
        %p262 = pneg %p88
        %s263 = sand.u32 %s21, 1
        %s264 = scalar_lea.sflag [#allocation7], %s263
        %s265 = sand.u32 %s104, 1
        %s266 = scalar_lea.vmem [#allocation8], %s265
        %p267 = pneg %p117
        %p268 = pneg %p114
        %p269 = pneg %p145
        %p270 = pneg %p142
        %s271 = sand.u32 %s132, 1
        %s272 = scalar_lea.sflag [#allocation5], %s271
        %s273 = sand.u32 %s132, 1
        %s274 = smul.addr %s273, 16
        %s275 = scalar_lea.vmem [#allocation9], %s274
        %s276 = smul.u32 2, %s26
        %s277 = smul.u32 16, %s28
        %s278 = smul.u32 2, %s26
        %p279 = scmp.eq.s32.totalorder %s28, 0
        // Predicated region
        $region45: #{tpu_custom_call.1} parent=31 // pred_check
          %p280 = pneg %p279
        $region46: #{tpu_custom_call.1} parent=31 // pred_check_branch
          %282 = sbr.rel (%p280) target = $region48
        $region47: #{tpu_custom_call.1} parent=31 // pred_region
          %283 = vst [vmem:[#allocation2] sm:$0xff] 0.0
          %284 = vst [vmem:[#allocation2 + $0x8] sm:$0xff] 0.0
        $region48: #{tpu_custom_call.1} parent=31 // pred_fallthru
          _
        %v285 = vld [vmem:[#allocation2] sm:$0xff]
        %v286 = vld [vmem:[#allocation2 + $0x8] sm:$0xff]
        %v287 = vld [vmem:[#allocation3] sm:$0xff]
        %v288 = vld [vmem:[#allocation3 + $0x8] sm:$0xff]
        %v289 = vld [vmem:[%s239] sm:$0xff]
        %v290 = vld [vmem:[%s239 + $0x8] sm:$0xff]
        %v291 = vld [vmem:[%s239 + $0x10] sm:$0xff]
        %v292 = vld [vmem:[%s239 + $0x18] sm:$0xff]
        %v293 = vld [vmem:[%s239 + $0x20] sm:$0xff]
        %v294 = vld [vmem:[%s239 + $0x28] sm:$0xff]
        %v295 = vld [vmem:[%s239 + $0x30] sm:$0xff]
        %v296 = vld [vmem:[%s239 + $0x38] sm:$0xff]
        %v297 = vld [vmem:[%s239 + $0x40] sm:$0xff]
        %v298 = vld [vmem:[%s239 + $0x48] sm:$0xff]
        %v299 = vld [vmem:[%s239 + $0x50] sm:$0xff]
        %v300 = vld [vmem:[%s239 + $0x58] sm:$0xff]
        %v301 = vld [vmem:[%s239 + $0x60] sm:$0xff]
        %v302 = vld [vmem:[%s239 + $0x68] sm:$0xff]
        %v303 = vld [vmem:[%s239 + $0x70] sm:$0xff]
        %v304 = vld [vmem:[%s239 + $0x78] sm:$0xff]
        %305 = vmatpush.msra.mxu0 %v304
        %306 = vmatpush.msra.mxu0 %v303
        %307 = vmatpush.msra.mxu0 %v302
        %308 = vmatpush.msra.mxu0 %v301
        %309 = vmatpush.msra.mxu0 %v300
        %310 = vmatpush.msra.mxu0 %v299
        %311 = vmatpush.msra.mxu0 %v298
        %312 = vmatpush.msra.mxu0 %v297
        %313 = vmatpush.msra.mxu0 %v296
        %314 = vmatpush.msra.mxu0 %v295
        %315 = vmatpush.msra.mxu0 %v294
        %316 = vmatpush.msra.mxu0 %v293
        %317 = vmatpush.msra.mxu0 %v292
        %318 = vmatpush.msra.mxu0 %v291
        %319 = vmatpush.msra.mxu0 %v290
        %320 = vmatpush.msra.mxu0 %v289
        %321 = vmatmul.f32.gmra.mxu0 %v287
        %v322 = vpop.f32.mrf.mxu0
        %v323 = vadd.f32 0.0, %v322
        %324 = vmatmul.f32.gmra.mxu0 %v288
        %v325 = vpop.f32.mrf.mxu0
        %v326 = vadd.f32 0.0, %v325
        %327 = vdwg.mxu0
        %v328 = vadd.f32 %v285, %v323
        %v329 = vadd.f32 %v286, %v326
        %330 = vst [vmem:[#allocation2] sm:$0xff] %v328
        %331 = vst [vmem:[#allocation2 + $0x8] sm:$0xff] %v329
        // Predicated region
        $region49: #{tpu_custom_call.1} parent=31 // pred_check
          %p332 = pneg %p279
        $region50: #{tpu_custom_call.1} parent=31 // pred_check_branch
          %334 = sbr.rel (%p332) target = $region52
        $region51: #{tpu_custom_call.1} parent=31 // pred_region
          %v335 = vld [vmem:[#allocation2] sm:$0xff]
          %v336 = vld [vmem:[#allocation2 + $0x8] sm:$0xff]
          %v337 = vld [vmem:[%s248] sm:$0x1]
          %v339 = vperm.slane %v337, 0
          %v341 = vadd.f32 %v335, %v339
          %v342 = vadd.f32 %v336, %v339
          %v343 = vtanh.pop %v341
          %v344 = vtanh.pop %v342
          %345 = vst [vmem:[%s275] sm:$0xff] %v343
          %346 = vst [vmem:[%s275 + $0x8] sm:$0xff] %v344
        $region52: #{tpu_custom_call.1} parent=31 // pred_fallthru
          _
        %s347 = sand.u32 %s132, 1
        %s348 = scalar_lea.sflag [#allocation5], %s347
        %s349 = sand.u32 %s132, 1
        %s350 = smul.addr %s349, 16
        %s351 = scalar_lea.vmem [#allocation9], %s350
        // Predicated region
        $region53: #{tpu_custom_call.1} parent=31 // pred_check
          %p352 = pneg %p142
        $region54: #{tpu_custom_call.1} parent=31 // pred_check_branch
          %354 = sbr.rel (%p352) target = $region56
        $region55: #{tpu_custom_call.1} parent=31 // pred_region
          %s355 = smul.u32 2, %s26
          %357 = vsyncadd %s348, 0
          %s358 = smul.addr %s355, 2
          %s359 = sadd.s32 %s27, %s358
          %s360 = smul.addr %s359, 8
          %s361 = scalar_lea.hbm %s3, %s360
          %s362 = sshll.u32 %s351, 4
          %s363 = int_to_ptr.vmem [resolvable:$true] %s362
          %s364 = sshll.u32 %s361, 4
          %s365 = int_to_ptr.hbm [resolvable:$true] %s364
          %370 = dma.vmem_to_hbm [thread:$0]  %s363, 256, %s365, %s348, 128, 256, 8
        $region56: #{tpu_custom_call.1} parent=31 // pred_fallthru
          _
      $region32: #{tpu_custom_call.1} parent=5 // pred_fallthru
        _
      %p371 = scmp.le.s32.totalorder 2, %s16
      // Predicated region
      $region57: #{tpu_custom_call.1} parent=5 // pred_check
        %p372 = pneg %p371
      $region58: #{tpu_custom_call.1} parent=5 // pred_check_branch
        %374 = sbr.rel (%p372) target = $region60
      $region59: #{tpu_custom_call.1} parent=5 // pred_region
        %s375 = ssub.s32 %s16, 2
        // Predicated region
        $region61: #{tpu_custom_call.1} parent=59 // pred_check
          %p376 = pneg %p148
        $region62: #{tpu_custom_call.1} parent=59 // pred_check_branch
          %378 = sbr.rel (%p376) target = $region64
        $region63: #{tpu_custom_call.1} parent=59 // pred_region
          %s379 = sand.u32 %s133, 1
          %s380 = scalar_lea.sflag [#allocation5], %s379
          %s381 = sand.u32 %s133, 1
          %s382 = smul.addr %s381, 16
          %s383 = scalar_lea.vmem [#allocation9], %s382
          %385 = dma.done %s380, 256
        $region64: #{tpu_custom_call.1} parent=59 // pred_fallthru
          _
      $region60: #{tpu_custom_call.1} parent=5 // pred_fallthru
        _
    $region6: #{tpu_custom_call.1} parent=1 // loop_footer
      %s20 = sadd.s32 1, %s16
    $region7: #{tpu_custom_call.1} parent=1 // loop_footer_branch
      %15 = sbr.rel target = $region3
    $region8: #{tpu_custom_call.1} parent=1 // loop_exit
      _
    %386 = vsyncpa [#allocation4], 1
    %s387 = scalar_lea.sflag [#allocation4], 1
    %388 = vsyncpa %s387, 1
    %389 = vsyncpa [#allocation7], 1
    %s390 = scalar_lea.sflag [#allocation7], 1
    %391 = vsyncpa %s390, 1
    %392 = vsyncpa [#allocation5], 1
    %s393 = scalar_lea.sflag [#allocation5], 1
    %394 = vsyncpa %s393, 1

</llo_original>
